<compile_context>
chip_gen: v5e
topology: v5e:2x2
jax: 0.10.0
libtpu: 0.0.40
codegen_flags: <defaults>
</compile_context>

<pallas_src>
import jax
import jax.numpy as jnp
from jax import lax
from jax.experimental import pallas as pl
from jax.experimental.pallas import tpu as pltpu


EPS = 1e-5


def _make_fc_kernel(num_layers):
    """One batch tile: x (TB, obs_dim) -> out (act_dim, TB), stacked Linear [+ ReLU]."""

    def kernel(x_ref, *refs):
        o_ref = refs[-1]
        wb = refs[:-1]                                    # w1, b1, w2, b2, ...

        # First layer: contract the feature axis of both operands (W1' @ x.T)
        # so no explicit in-kernel transpose of the x tile is required; the
        # result is feature-major (h1, TB) and every later intermediate plus
        # the final (act_dim, TB) store is lane-dense.
        w0 = wb[0][...]                                   # (h1, obs_dim)
        b0 = wb[1][...]                                   # (h1, 1) f32
        x = x_ref[...]                                    # (TB, obs_dim)
        h = lax.dot_general(
            w0, x.astype(w0.dtype),
            dimension_numbers=(((1,), (1,)), ((), ())),
            preferred_element_type=jnp.float32) + b0
        if num_layers > 1:                                # dropout(p=0) == identity
            h = jnp.maximum(h, 0.0)                       # relu, f32 on the VPU

        for i in range(1, num_layers):
            w = wb[2 * i][...]                            # (out_i, in_i)
            b = wb[2 * i + 1][...]                        # (out_i, 1) f32
            h = jnp.dot(w, h.astype(w.dtype),
                        preferred_element_type=jnp.float32) + b
            if i < num_layers - 1:
                h = jnp.maximum(h, 0.0)

        o_ref[...] = h.astype(o_ref.dtype)                # lane-dense (act_dim, TB) store

    return kernel


def _pick_batch_tile(batch):
    """Largest lane-dense tile keeping >= 8 grid steps (>= 4 per v7x core)."""
    for cand in (1024, 512, 256, 128):
        if pl.cdiv(batch, cand) >= 8:
            return cand
    return 128


def fc_network_with_batchnorm(x, params, *, batch_tile=None,
                              feature_major_output=False, matmul_dtype=None):
    """Forward pass of FCNetworkWithBatchNorm.

    x:      (batch, obs_dim) float32
    params: gamma/beta (obs_dim,), w{i} (out_i, in_i) [PyTorch layout], b{i} (out_i,)
    """
    batch, obs_dim = x.shape
    num_layers = len([k for k in params if k.startswith("w")])
    act_dim = params[f"w{num_layers}"].shape[0]
    layer_in = [params[f"w{i}"].shape[1] for i in range(1, num_layers + 1)]
    layer_out = [params[f"w{i}"].shape[0] for i in range(1, num_layers + 1)]

    # ---- BatchNorm (training-mode batch stats) folded into the first Linear ----
    # mean and E[x^2] fuse into a single reduction pass over x in XLA.
    mean = jnp.mean(x, axis=0)
    mean_sq = jnp.mean(x * x, axis=0)
    var = jnp.maximum(mean_sq - mean * mean, 0.0)         # clamp guards cancellation
    scale = params["gamma"] * lax.rsqrt(var + EPS)        # (obs_dim,)
    shift = params["beta"] - mean * scale                 # (obs_dim,)
    w1 = params["w1"]                                     # (h1, obs_dim)
    w_eff = [w1 * scale[None, :]] + [params[f"w{i}"] for i in range(2, num_layers + 1)]
    b_eff = [params["b1"] + w1 @ shift] + [params[f"b{i}"] for i in range(2, num_layers + 1)]
    # TODO(synk): running_mean / running_var buffer updates of BatchNorm1d are
    # module state, not part of the functional forward output; omitted here.

    # bf16 matmul operands once layers are wide enough to matter for DMA/MXU;
    # bias add, relu, and accumulation stay f32 (v5e has no bf16 VPU/EUP).
    if matmul_dtype is None:
        matmul_dtype = jnp.bfloat16 if max(layer_in + layer_out) >= 512 else jnp.float32
    w_eff = [w.astype(matmul_dtype) for w in w_eff]

    if batch_tile is None:
        batch_tile = _pick_batch_tile(batch)
    padded = batch_tile * pl.cdiv(batch, batch_tile)
    x_in = x if padded == batch else jnp.pad(x, ((0, padded - batch), (0, 0)))
    grid = (padded // batch_tile,)

    args = [x_in]
    in_specs = [pl.BlockSpec((batch_tile, obs_dim), lambda j: (j, 0))]
    for w, b in zip(w_eff, b_eff):
        args += [w, b[:, None].astype(jnp.float32)]
        # Constant index_map -> weights/biases stay VMEM-resident across steps.
        # TODO(synk): pipeline_mode=pl.Buffered(1) + vmem_limit_bytes once layer
        # widths approach the v7x 64 MiB / v5e 16 MiB-scoped VMEM budgets.
        in_specs += [pl.BlockSpec(w.shape, lambda j: (0, 0)),
                     pl.BlockSpec((b.shape[0], 1), lambda j: (0, 0))]

    flops = 2 * padded * sum(i * o for i, o in zip(layer_in, layer_out))
    bytes_accessed = (x_in.size * x_in.dtype.itemsize
                      + sum(w.size * w.dtype.itemsize for w in w_eff)
                      + sum(int(b.shape[0]) * 4 for b in b_eff)
                      + act_dim * padded * 4)

    out_t = pl.pallas_call(
        _make_fc_kernel(num_layers),
        out_shape=jax.ShapeDtypeStruct((act_dim, padded), jnp.float32),
        grid=grid,
        in_specs=in_specs,
        out_specs=pl.BlockSpec((act_dim, batch_tile), lambda j: (0, j)),
        compiler_params=pltpu.CompilerParams(dimension_semantics=("parallel",)),
        cost_estimate=pl.CostEstimate(flops=flops, transcendentals=0,
                                      bytes_accessed=bytes_accessed),
    )(*args)

    if feature_major_output:
        return out_t[:, :batch]            # (act_dim, batch): skip the transpose pass
    # Layout plumbing back to the PyTorch (batch, act_dim) convention.
    return out_t[:, :batch].T


def init_params(key, obs_dim, hidden_sizes, act_dim):
    """Parameters in PyTorch layout: w_i (out, in), b_i (out,); BN affine gamma/beta."""
    sizes = (obs_dim,) + tuple(hidden_sizes) + (act_dim,)
    key, kg, kb = jax.random.split(key, 3)
    params = {
        # Perturbed affine params to exercise the full BN-folding path
        # (PyTorch defaults are gamma=1, beta=0).
        "gamma": 1.0 + 0.1 * jax.random.normal(kg, (obs_dim,), jnp.float32),
        "beta": 0.1 * jax.random.normal(kb, (obs_dim,), jnp.float32),
    }
    for i in range(len(sizes) - 1):
        fan_in, fan_out = sizes[i], sizes[i + 1]
        key, kw, kbi = jax.random.split(key, 3)
        bound = 1.0 / jnp.sqrt(fan_in)
        params[f"w{i + 1}"] = jax.random.uniform(
            kw, (fan_out, fan_in), jnp.float32, -bound, bound)
        params[f"b{i + 1}"] = jax.random.uniform(
            kbi, (fan_out,), jnp.float32, -bound, bound)
    return params


def reference_forward(x, params):
    """Pure-JAX unfused reference (mirrors the PyTorch forward exactly)."""
    num_layers = len([k for k in params if k.startswith("w")])
    mean = jnp.mean(x, axis=0)
    var = jnp.mean((x - mean) ** 2, axis=0)
    h = (x - mean) / jnp.sqrt(var + EPS) * params["gamma"] + params["beta"]
    for i in range(1, num_layers):
        h = jnp.maximum(h @ params[f"w{i}"].T + params[f"b{i}"], 0.0)
    return h @ params[f"w{num_layers}"].T + params[f"b{num_layers}"]


if __name__ == "__main__":
    obs_dim, act_dim = 16, 8
    hidden_sizes = (64, 64)          # module default
    batch = 256                      # 2 lane-dense batch tiles of 128

    key = jax.random.PRNGKey(0)
    key, kx = jax.random.split(key)
    x = jax.random.normal(kx, (batch, obs_dim), jnp.float32)
    params = init_params(key, obs_dim, hidden_sizes, act_dim)

    out = fc_network_with_batchnorm(x, params)
    out = jax.block_until_ready(out)

    ref = reference_forward(x, params)
    assert out.shape == (batch, act_dim)
    assert jnp.allclose(out, ref, atol=1e-3, rtol=1e-3), "mismatch vs reference"

    # TODO(synk): tensorboard SummaryWriter, activation hooks, and the
    # `print(out)` side effect have no kernel equivalent and are omitted.
    print("KERNEL_OK")
</pallas_src>

<mosaic_0001>
module attributes {stable_mosaic.version = 11 : i64} {
  func.func @kernel(%arg0: i32, %arg1: memref<128x16xf32, #tpu.memory_space<vmem>>, %arg2: memref<64x16xf32, #tpu.memory_space<vmem>>, %arg3: memref<64x1xf32, #tpu.memory_space<vmem>>, %arg4: memref<64x64xf32, #tpu.memory_space<vmem>>, %arg5: memref<64x1xf32, #tpu.memory_space<vmem>>, %arg6: memref<8x64xf32, #tpu.memory_space<vmem>>, %arg7: memref<8x1xf32, #tpu.memory_space<vmem>>, %arg8: memref<8x128xf32, #tpu.memory_space<vmem>>) attributes {dimension_semantics = [#tpu.dimension_semantics<parallel>], iteration_bounds = array<i64: 2>, scalar_prefetch = 0 : i64, scratch_operands = 0 : i64, tpu.core_type = #tpu.core_type<tc>, window_params = [{transform_indices = @transform_0, window_bounds = array<i64: 128, 16>}, {pipeline_mode = #tpu.pipeline_mode<synchronous>, transform_indices = @transform_1, window_bounds = array<i64: 64, 16>}, {pipeline_mode = #tpu.pipeline_mode<synchronous>, transform_indices = @transform_2, window_bounds = array<i64: 64, 1>}, {pipeline_mode = #tpu.pipeline_mode<synchronous>, transform_indices = @transform_3, window_bounds = array<i64: 64, 64>}, {pipeline_mode = #tpu.pipeline_mode<synchronous>, transform_indices = @transform_4, window_bounds = array<i64: 64, 1>}, {pipeline_mode = #tpu.pipeline_mode<synchronous>, transform_indices = @transform_5, window_bounds = array<i64: 8, 64>}, {pipeline_mode = #tpu.pipeline_mode<synchronous>, transform_indices = @transform_6, window_bounds = array<i64: 8, 1>}, {transform_indices = @transform_7, window_bounds = array<i64: 8, 128>}]} {
    %c0 = arith.constant 0 : index
    %c0_0 = arith.constant 0 : index
    %0 = vector.load %arg2[%c0, %c0_0] : memref<64x16xf32, #tpu.memory_space<vmem>>, vector<64x16xf32>
    %c0_1 = arith.constant 0 : index
    %c0_2 = arith.constant 0 : index
    %1 = vector.load %arg3[%c0_1, %c0_2] : memref<64x1xf32, #tpu.memory_space<vmem>>, vector<64x1xf32>
    %c0_3 = arith.constant 0 : index
    %c0_4 = arith.constant 0 : index
    %2 = vector.load %arg1[%c0_3, %c0_4] : memref<128x16xf32, #tpu.memory_space<vmem>>, vector<128x16xf32>
    %cst = arith.constant dense<0.000000e+00> : vector<64x128xf32>
    %3 = tpu.matmul %0, %2, %cst {dimension_numbers = #tpu.dot_dimension_numbers<[1], [1], [0], [0], [0, 0, 1, 0], [], []>} : vector<64x16xf32>, vector<128x16xf32>, vector<64x128xf32> -> vector<64x128xf32>
    %4 = vector.broadcast %1 : vector<64x1xf32> to vector<64x128xf32>
    %5 = arith.addf %3, %4 : vector<64x128xf32>
    %cst_5 = arith.constant 0.000000e+00 : f32
    %6 = vector.broadcast %cst_5 : f32 to vector<64x128xf32>
    %7 = arith.maximumf %5, %6 : vector<64x128xf32>
    %c0_6 = arith.constant 0 : index
    %c0_7 = arith.constant 0 : index
    %8 = vector.load %arg4[%c0_6, %c0_7] : memref<64x64xf32, #tpu.memory_space<vmem>>, vector<64x64xf32>
    %c0_8 = arith.constant 0 : index
    %c0_9 = arith.constant 0 : index
    %9 = vector.load %arg5[%c0_8, %c0_9] : memref<64x1xf32, #tpu.memory_space<vmem>>, vector<64x1xf32>
    %cst_10 = arith.constant dense<0.000000e+00> : vector<64x128xf32>
    %10 = tpu.matmul %8, %7, %cst_10 {dimension_numbers = #tpu.dot_dimension_numbers<[1], [0], [0], [1], [0, 0, 1, 1], [], []>} : vector<64x64xf32>, vector<64x128xf32>, vector<64x128xf32> -> vector<64x128xf32>
    %11 = vector.broadcast %9 : vector<64x1xf32> to vector<64x128xf32>
    %12 = arith.addf %10, %11 : vector<64x128xf32>
    %cst_11 = arith.constant 0.000000e+00 : f32
    %13 = vector.broadcast %cst_11 : f32 to vector<64x128xf32>
    %14 = arith.maximumf %12, %13 : vector<64x128xf32>
    %c0_12 = arith.constant 0 : index
    %c0_13 = arith.constant 0 : index
    %15 = vector.load %arg6[%c0_12, %c0_13] : memref<8x64xf32, #tpu.memory_space<vmem>>, vector<8x64xf32>
    %c0_14 = arith.constant 0 : index
    %c0_15 = arith.constant 0 : index
    %16 = vector.load %arg7[%c0_14, %c0_15] : memref<8x1xf32, #tpu.memory_space<vmem>>, vector<8x1xf32>
    %cst_16 = arith.constant dense<0.000000e+00> : vector<8x128xf32>
    %17 = tpu.matmul %15, %14, %cst_16 {dimension_numbers = #tpu.dot_dimension_numbers<[1], [0], [0], [1], [0, 0, 1, 1], [], []>} : vector<8x64xf32>, vector<64x128xf32>, vector<8x128xf32> -> vector<8x128xf32>
    %18 = vector.broadcast %16 : vector<8x1xf32> to vector<8x128xf32>
    %19 = arith.addf %17, %18 : vector<8x128xf32>
    %c0_17 = arith.constant 0 : index
    %c0_18 = arith.constant 0 : index
    %20 = vector.load %arg8[%c0_17, %c0_18] : memref<8x128xf32, #tpu.memory_space<vmem>>, vector<8x128xf32>
    tpu.vector_store %arg8[%c0_17, %c0_18], %19 {strides = array<i32>} : memref<8x128xf32, #tpu.memory_space<vmem>>, vector<8x128xf32>,
    return
  }
  func.func @transform_0(%arg0: i32) -> (i32, i32) {
    %c0_i32 = arith.constant 0 : i32
    %c0_i32_0 = arith.constant 0 : i32
    return %arg0, %c0_i32 : i32, i32
  }
  func.func @transform_1(%arg0: i32) -> (i32, i32) {
    %c0_i32 = arith.constant 0 : i32
    %c0_i32_0 = arith.constant 0 : i32
    %c0_i32_1 = arith.constant 0 : i32
    return %c0_i32, %c0_i32_0 : i32, i32
  }
  func.func @transform_2(%arg0: i32) -> (i32, i32) {
    %c0_i32 = arith.constant 0 : i32
    %c0_i32_0 = arith.constant 0 : i32
    %c0_i32_1 = arith.constant 0 : i32
    return %c0_i32, %c0_i32_0 : i32, i32
  }
  func.func @transform_3(%arg0: i32) -> (i32, i32) {
    %c0_i32 = arith.constant 0 : i32
    %c0_i32_0 = arith.constant 0 : i32
    %c0_i32_1 = arith.constant 0 : i32
    return %c0_i32, %c0_i32_0 : i32, i32
  }
  func.func @transform_4(%arg0: i32) -> (i32, i32) {
    %c0_i32 = arith.constant 0 : i32
    %c0_i32_0 = arith.constant 0 : i32
    %c0_i32_1 = arith.constant 0 : i32
    return %c0_i32, %c0_i32_0 : i32, i32
  }
  func.func @transform_5(%arg0: i32) -> (i32, i32) {
    %c0_i32 = arith.constant 0 : i32
    %c0_i32_0 = arith.constant 0 : i32
    %c0_i32_1 = arith.constant 0 : i32
    return %c0_i32, %c0_i32_0 : i32, i32
  }
  func.func @transform_6(%arg0: i32) -> (i32, i32) {
    %c0_i32 = arith.constant 0 : i32
    %c0_i32_0 = arith.constant 0 : i32
    %c0_i32_1 = arith.constant 0 : i32
    return %c0_i32, %c0_i32_0 : i32, i32
  }
  func.func @transform_7(%arg0: i32) -> (i32, i32) {
    %c0_i32 = arith.constant 0 : i32
    %c0_i32_0 = arith.constant 0 : i32
    return %c0_i32, %arg0 : i32, i32
  }
}

</mosaic_0001>

<llo_original>
// kernel: tpu_custom_call.1
$region0: #{tpu_custom_call.1}
  #allocation0 [shape = 'u32[]', space=smem, size = 0x4, offset = 0x4, fixed_abs, tag = 'smem constant byte address 0x4 - core index']
  #allocation1 [shape = 'u32[72,128]{1,0:T(1,128)}', space=vmem, size = 0x9000, scoped, tag = 'internal scratch']
  %s0 = inlined_call_operand.vmem [shape: f32[256,16], index: 0, kind: input, shape index: {}]
  %s1 = inlined_call_operand.vmem [shape: f32[64,16], index: 1, kind: input, shape index: {}]
  %s2 = inlined_call_operand.vmem [shape: f32[64,1], index: 2, kind: input, shape index: {}]
  %s3 = inlined_call_operand.vmem [shape: f32[64,64], index: 3, kind: input, shape index: {}]
  %s4 = inlined_call_operand.vmem [shape: f32[64,1], index: 4, kind: input, shape index: {}]
  %s5 = inlined_call_operand.vmem [shape: f32[8,64], index: 5, kind: input, shape index: {}]
  %s6 = inlined_call_operand.vmem [shape: f32[8,1], index: 6, kind: input, shape index: {}]
  %s7 = inlined_call_operand.hbm [shape: f32[8,256], index: 7, kind: output, shape index: {}]
  %s8 = sld [smem:[#allocation0]]
  $region61: #{tpu_custom_call.1} parent=0
    _
  %s10 = ssub.s32 1, %s8
  %s11 = scalar_select 0, %s10, %s8
  $region1: #{tpu_custom_call.1} parent=0
    #allocation2 [shape = 'u8[8192]{0}', space=vmem, size = 0x2000, scoped, tag = 'output window, operand 0']
    #allocation3 [shape = 's32[2]{0}', space=sflag, size = 0x8, scoped, tag = 'scoped memory for tpu_custom_call.1']
    %12 = vsyncpa [#allocation3], 0
    %s13 = scalar_lea.sflag [#allocation3], 1
    %14 = vsyncpa %s13, 0
    loop: start=0, step=1, limit=4
    $region2: #{tpu_custom_call.1} parent=1 // loop_pre_header
      _
    $region3: #{tpu_custom_call.1} parent=1 // loop_header
      %s16 = sphi 0, %s20
      %p17 = scmp.ge.s32.totalorder %s16, 4
      %s26 = sphi 0, %s28
      %s29 = sphi 0, %s26
      %s30 = sphi 0, %s29
      %s46 = sphi 0, %s30
      %s50 = sphi 0, %s50
      %s52 = sphi 0, %s50
      %s53 = sphi 0, %s52
      %s67 = sphi 0, %s53
      %s71 = sphi 0, %s71
      %s73 = sphi 0, %s71
      %s74 = sphi 0, %s73
      %s88 = sphi 0, %s74
      %s92 = sphi 0, %s92
      %s94 = sphi 0, %s92
      %s95 = sphi 0, %s94
      %s109 = sphi 0, %s95
      %s113 = sphi 0, %s113
      %s115 = sphi 0, %s113
      %s116 = sphi 0, %s115
      %s130 = sphi 0, %s116
      %s134 = sphi 0, %s134
      %s136 = sphi 0, %s134
      %s137 = sphi 0, %s136
      %s151 = sphi 0, %s137
      %s155 = sphi 0, %s155
      %s157 = sphi 0, %s155
      %s158 = sphi 0, %s157
      %s172 = sphi 0, %s158
      %s178 = sphi 0, %s180
      %s181 = sphi 0, %s178
      %s182 = sphi 0, %s181
      %s198 = sphi 0, %s182
    $region4: #{tpu_custom_call.1} parent=1 // loop_header_branch
      %19 = sbr.rel (%p17) target = $region8
    $region5: #{tpu_custom_call.1} parent=1 // loop_body
      %s21 = ssub.s32 %s16, 1
      %s22 = ssub.s32 %s16, 2
      %s23 = sadd.s32 %s16, 1
      %s24 = ssub.s32 %s16, %s23
      %p25 = scmp.eq.s32.totalorder %s24, 0
      %s27 = sadd.s32 %s26, 1
      %s28 = scalar_select %p25, %s26, %s27
      %p31 = pneg %p25
      %p32 = scmp.eq.s32.totalorder %s16, 1
      %p33 = por %p31, %p32
      %p34 = scmp.ne.s32.totalorder %s26, %s29
      %p35 = scmp.eq.s32.totalorder %s16, 0
      %p36 = por %p34, %p35
      %p37 = scmp.ne.s32.totalorder %s26, %s29
      %p38 = scmp.eq.s32.totalorder %s21, 1
      %p39 = por %p37, %p38
      %p40 = scmp.ne.s32.totalorder %s29, %s30
      %p41 = scmp.eq.s32.totalorder %s21, 0
      %p42 = por %p40, %p41
      %p43 = scmp.ne.s32.totalorder %s29, %s30
      %p44 = scmp.eq.s32.totalorder %s22, 1
      %p45 = por %p43, %p44
      %p47 = scmp.ne.s32.totalorder %s30, %s46
      %p48 = scmp.eq.s32.totalorder %s22, 0
      %p49 = por %p47, %p48
      %s51 = sadd.s32 %s50, 1
      %p54 = scmp.eq.s32.totalorder %s16, 1
      %p55 = scmp.ne.s32.totalorder %s50, %s52
      %p56 = scmp.eq.s32.totalorder %s16, 0
      %p57 = por %p55, %p56
      %p58 = scmp.ne.s32.totalorder %s50, %s52
      %p59 = scmp.eq.s32.totalorder %s21, 1
      %p60 = por %p58, %p59
      %p61 = scmp.ne.s32.totalorder %s52, %s53
      %p62 = scmp.eq.s32.totalorder %s21, 0
      %p63 = por %p61, %p62
      %p64 = scmp.ne.s32.totalorder %s52, %s53
      %p65 = scmp.eq.s32.totalorder %s22, 1
      %p66 = por %p64, %p65
      %p68 = scmp.ne.s32.totalorder %s53, %s67
      %p69 = scmp.eq.s32.totalorder %s22, 0
      %p70 = por %p68, %p69
      %s72 = sadd.s32 %s71, 1
      %p75 = scmp.eq.s32.totalorder %s16, 1
      %p76 = scmp.ne.s32.totalorder %s71, %s73
      %p77 = scmp.eq.s32.totalorder %s16, 0
      %p78 = por %p76, %p77
      %p79 = scmp.ne.s32.totalorder %s71, %s73
      %p80 = scmp.eq.s32.totalorder %s21, 1
      %p81 = por %p79, %p80
      %p82 = scmp.ne.s32.totalorder %s73, %s74
      %p83 = scmp.eq.s32.totalorder %s21, 0
      %p84 = por %p82, %p83
      %p85 = scmp.ne.s32.totalorder %s73, %s74
      %p86 = scmp.eq.s32.totalorder %s22, 1
      %p87 = por %p85, %p86
      %p89 = scmp.ne.s32.totalorder %s74, %s88
      %p90 = scmp.eq.s32.totalorder %s22, 0
      %p91 = por %p89, %p90
      %s93 = sadd.s32 %s92, 1
      %p96 = scmp.eq.s32.totalorder %s16, 1
      %p97 = scmp.ne.s32.totalorder %s92, %s94
      %p98 = scmp.eq.s32.totalorder %s16, 0
      %p99 = por %p97, %p98
      %p100 = scmp.ne.s32.totalorder %s92, %s94
      %p101 = scmp.eq.s32.totalorder %s21, 1
      %p102 = por %p100, %p101
      %p103 = scmp.ne.s32.totalorder %s94, %s95
      %p104 = scmp.eq.s32.totalorder %s21, 0
      %p105 = por %p103, %p104
      %p106 = scmp.ne.s32.totalorder %s94, %s95
      %p107 = scmp.eq.s32.totalorder %s22, 1
      %p108 = por %p106, %p107
      %p110 = scmp.ne.s32.totalorder %s95, %s109
      %p111 = scmp.eq.s32.totalorder %s22, 0
      %p112 = por %p110, %p111
      %s114 = sadd.s32 %s113, 1
      %p117 = scmp.eq.s32.totalorder %s16, 1
      %p118 = scmp.ne.s32.totalorder %s113, %s115
      %p119 = scmp.eq.s32.totalorder %s16, 0
      %p120 = por %p118, %p119
      %p121 = scmp.ne.s32.totalorder %s113, %s115
      %p122 = scmp.eq.s32.totalorder %s21, 1
      %p123 = por %p121, %p122
      %p124 = scmp.ne.s32.totalorder %s115, %s116
      %p125 = scmp.eq.s32.totalorder %s21, 0
      %p126 = por %p124, %p125
      %p127 = scmp.ne.s32.totalorder %s115, %s116
      %p128 = scmp.eq.s32.totalorder %s22, 1
      %p129 = por %p127, %p128
      %p131 = scmp.ne.s32.totalorder %s116, %s130
      %p132 = scmp.eq.s32.totalorder %s22, 0
      %p133 = por %p131, %p132
      %s135 = sadd.s32 %s134, 1
      %p138 = scmp.eq.s32.totalorder %s16, 1
      %p139 = scmp.ne.s32.totalorder %s134, %s136
      %p140 = scmp.eq.s32.totalorder %s16, 0
      %p141 = por %p139, %p140
      %p142 = scmp.ne.s32.totalorder %s134, %s136
      %p143 = scmp.eq.s32.totalorder %s21, 1
      %p144 = por %p142, %p143
      %p145 = scmp.ne.s32.totalorder %s136, %s137
      %p146 = scmp.eq.s32.totalorder %s21, 0
      %p147 = por %p145, %p146
      %p148 = scmp.ne.s32.totalorder %s136, %s137
      %p149 = scmp.eq.s32.totalorder %s22, 1
      %p150 = por %p148, %p149
      %p152 = scmp.ne.s32.totalorder %s137, %s151
      %p153 = scmp.eq.s32.totalorder %s22, 0
      %p154 = por %p152, %p153
      %s156 = sadd.s32 %s155, 1
      %p159 = scmp.eq.s32.totalorder %s16, 1
      %p160 = scmp.ne.s32.totalorder %s155, %s157
      %p161 = scmp.eq.s32.totalorder %s16, 0
      %p162 = por %p160, %p161
      %p163 = scmp.ne.s32.totalorder %s155, %s157
      %p164 = scmp.eq.s32.totalorder %s21, 1
      %p165 = por %p163, %p164
      %p166 = scmp.ne.s32.totalorder %s157, %s158
      %p167 = scmp.eq.s32.totalorder %s21, 0
      %p168 = por %p166, %p167
      %p169 = scmp.ne.s32.totalorder %s157, %s158
      %p170 = scmp.eq.s32.totalorder %s22, 1
      %p171 = por %p169, %p170
      %p173 = scmp.ne.s32.totalorder %s158, %s172
      %p174 = scmp.eq.s32.totalorder %s22, 0
      %p175 = por %p173, %p174
      %s176 = ssub.s32 %s16, %s23
      %p177 = scmp.eq.s32.totalorder %s176, 0
      %s179 = sadd.s32 %s178, 1
      %s180 = scalar_select %p177, %s178, %s179
      %p183 = pneg %p177
      %p184 = scmp.eq.s32.totalorder %s16, 1
      %p185 = por %p183, %p184
      %p186 = scmp.ne.s32.totalorder %s178, %s181
      %p187 = scmp.eq.s32.totalorder %s16, 0
      %p188 = por %p186, %p187
      %p189 = scmp.ne.s32.totalorder %s178, %s181
      %p190 = scmp.eq.s32.totalorder %s21, 1
      %p191 = por %p189, %p190
      %p192 = scmp.ne.s32.totalorder %s181, %s182
      %p193 = scmp.eq.s32.totalorder %s21, 0
      %p194 = por %p192, %p193
      %p195 = scmp.ne.s32.totalorder %s181, %s182
      %p196 = scmp.eq.s32.totalorder %s22, 1
      %p197 = por %p195, %p196
      %p199 = scmp.ne.s32.totalorder %s182, %s198
      %p200 = scmp.eq.s32.totalorder %s22, 0
      %p201 = por %p199, %p200
      %p202 = scmp.le.s32.totalorder 1, %s16
      %p203 = scmp.lt.s32.totalorder %s16, 3
      %p204 = pnand %p202, %p203
      %p205 = pneg %p204
      // Predicated region
      $region9: #{tpu_custom_call.1} parent=5 // pred_check
        _
      $region10: #{tpu_custom_call.1} parent=5 // pred_check_branch
        %207 = sbr.rel (%p204) target = $region12
      $region11: #{tpu_custom_call.1} parent=5 // pred_region
        %s208 = ssub.s32 %s16, 1
        // Predicated region
        $region13: #{tpu_custom_call.1} parent=11 // pred_check
          %p209 = pneg %p63
        $region14: #{tpu_custom_call.1} parent=11 // pred_check_branch
          %211 = sbr.rel (%p209) target = $region16
        $region15: #{tpu_custom_call.1} parent=11 // pred_region
          _
        $region16: #{tpu_custom_call.1} parent=11 // pred_fallthru
          _
        // Predicated region
        $region17: #{tpu_custom_call.1} parent=11 // pred_check
          %p212 = pneg %p84
        $region18: #{tpu_custom_call.1} parent=11 // pred_check_branch
          %214 = sbr.rel (%p212) target = $region20
        $region19: #{tpu_custom_call.1} parent=11 // pred_region
          _
        $region20: #{tpu_custom_call.1} parent=11 // pred_fallthru
          _
        // Predicated region
        $region21: #{tpu_custom_call.1} parent=11 // pred_check
          %p215 = pneg %p105
        $region22: #{tpu_custom_call.1} parent=11 // pred_check_branch
          %217 = sbr.rel (%p215) target = $region24
        $region23: #{tpu_custom_call.1} parent=11 // pred_region
          _
        $region24: #{tpu_custom_call.1} parent=11 // pred_fallthru
          _
        // Predicated region
        $region25: #{tpu_custom_call.1} parent=11 // pred_check
          %p218 = pneg %p126
        $region26: #{tpu_custom_call.1} parent=11 // pred_check_branch
          %220 = sbr.rel (%p218) target = $region28
        $region27: #{tpu_custom_call.1} parent=11 // pred_region
          _
        $region28: #{tpu_custom_call.1} parent=11 // pred_fallthru
          _
        // Predicated region
        $region29: #{tpu_custom_call.1} parent=11 // pred_check
          %p221 = pneg %p147
        $region30: #{tpu_custom_call.1} parent=11 // pred_check_branch
          %223 = sbr.rel (%p221) target = $region32
        $region31: #{tpu_custom_call.1} parent=11 // pred_region
          _
        $region32: #{tpu_custom_call.1} parent=11 // pred_fallthru
          _
        // Predicated region
        $region33: #{tpu_custom_call.1} parent=11 // pred_check
          %p224 = pneg %p168
        $region34: #{tpu_custom_call.1} parent=11 // pred_check_branch
          %226 = sbr.rel (%p224) target = $region36
        $region35: #{tpu_custom_call.1} parent=11 // pred_region
          _
        $region36: #{tpu_custom_call.1} parent=11 // pred_fallthru
          _
      $region12: #{tpu_custom_call.1} parent=5 // pred_fallthru
        _
      %p227 = scmp.lt.s32.totalorder %s16, 2
      // Predicated region
      $region37: #{tpu_custom_call.1} parent=5 // pred_check
        %p228 = pneg %p227
      $region38: #{tpu_custom_call.1} parent=5 // pred_check_branch
        %230 = sbr.rel (%p228) target = $region40
      $region39: #{tpu_custom_call.1} parent=5 // pred_region
        // Predicated region
        $region41: #{tpu_custom_call.1} parent=39 // pred_check
          %p231 = pneg %p36
        $region42: #{tpu_custom_call.1} parent=39 // pred_check_branch
          %233 = sbr.rel (%p231) target = $region44
        $region43: #{tpu_custom_call.1} parent=39 // pred_region
          %s234 = smul.u32 16, %s16
          %p235 = scmp.lt.s32.totalorder %s234, 31
          %s236 = scalar_select %p235, %s234, 31
          %s237 = smul.addr %s236, 8
          %s238 = scalar_lea.vmem %s0, %s237
          %s239 = smul.u32 16, %s16
        $region44: #{tpu_custom_call.1} parent=39 // pred_fallthru
          _
      $region40: #{tpu_custom_call.1} parent=5 // pred_fallthru
        _
      %p240 = scmp.le.s32.totalorder 1, %s16
      %p241 = scmp.lt.s32.totalorder %s16, 3
      %p242 = pnand %p240, %p241
      %p243 = pneg %p242
      // Predicated region
      $region45: #{tpu_custom_call.1} parent=5 // pred_check
        _
      $region46: #{tpu_custom_call.1} parent=5 // pred_check_branch
        %245 = sbr.rel (%p242) target = $region48
      $region47: #{tpu_custom_call.1} parent=5 // pred_region
        %s246 = ssub.s32 %s16, 1
        %s247 = smul.u32 16, %s21
        %p248 = scmp.lt.s32.totalorder %s247, 31
        %s249 = scalar_select %p248, %s247, 31
        %s250 = smul.addr %s249, 8
        %s251 = scalar_lea.vmem %s0, %s250
        %p252 = pneg %p42
        %p253 = pneg %p39
        %p254 = pneg %p63
        %p255 = pneg %p60
        %p256 = pneg %p84
        %p257 = pneg %p81
        %p258 = pneg %p105
        %p259 = pneg %p102
        %p260 = pneg %p126
        %p261 = pneg %p123
        %p262 = pneg %p147
        %p263 = pneg %p144
        %p264 = pneg %p168
        %p265 = pneg %p165
        %p266 = pneg %p194
        %p267 = pneg %p191
        %s268 = sand.u32 %s181, 1
        %s269 = scalar_lea.sflag [#allocation3], %s268
        %s270 = sand.u32 %s181, 1
        %s271 = smul.addr %s270, 8
        %s272 = scalar_lea.vmem [#allocation2], %s271
        %s273 = smul.u32 16, %s21
        %p274 = scmp.lt.s32.totalorder %s273, 31
        %s275 = scalar_select %p274, %s273, 31
        %s276 = smul.addr %s275, 8
        %s277 = scalar_lea.vmem %s0, %s276
        %s278 = smul.u32 16, %s21
        %v279 = vld [vmem:[%s1] sm:$0xff]
        %v280 = vld [vmem:[%s1 + $0x8] sm:$0xff]
        %v281 = vld [vmem:[%s1 + $0x10] sm:$0xff]
        %v282 = vld [vmem:[%s1 + $0x18] sm:$0xff]
        %v283 = vld [vmem:[%s1 + $0x20] sm:$0xff]
        %v284 = vld [vmem:[%s1 + $0x28] sm:$0xff]
        %v285 = vld [vmem:[%s1 + $0x30] sm:$0xff]
        %v286 = vld [vmem:[%s1 + $0x38] sm:$0xff]
        %v287 = vld [vmem:[%s2] sm:$0xff]
        %v288 = vld [vmem:[%s2 + $0x8] sm:$0xff]
        %v289 = vld [vmem:[%s2 + $0x10] sm:$0xff]
        %v290 = vld [vmem:[%s2 + $0x18] sm:$0xff]
        %v291 = vld [vmem:[%s2 + $0x20] sm:$0xff]
        %v292 = vld [vmem:[%s2 + $0x28] sm:$0xff]
        %v293 = vld [vmem:[%s2 + $0x30] sm:$0xff]
        %v294 = vld [vmem:[%s2 + $0x38] sm:$0xff]
        %v295 = vld [vmem:[%s277] sm:$0xff]
        %v296 = vld [vmem:[%s277 + $0x8] sm:$0xff]
        %v297 = vld [vmem:[%s277 + $0x10] sm:$0xff]
        %v298 = vld [vmem:[%s277 + $0x18] sm:$0xff]
        %v299 = vld [vmem:[%s277 + $0x20] sm:$0xff]
        %v300 = vld [vmem:[%s277 + $0x28] sm:$0xff]
        %v301 = vld [vmem:[%s277 + $0x30] sm:$0xff]
        %v302 = vld [vmem:[%s277 + $0x38] sm:$0xff]
        %v303 = vld [vmem:[%s277 + $0x40] sm:$0xff]
        %v304 = vld [vmem:[%s277 + $0x48] sm:$0xff]
        %v305 = vld [vmem:[%s277 + $0x50] sm:$0xff]
        %v306 = vld [vmem:[%s277 + $0x58] sm:$0xff]
        %v307 = vld [vmem:[%s277 + $0x60] sm:$0xff]
        %v308 = vld [vmem:[%s277 + $0x68] sm:$0xff]
        %v309 = vld [vmem:[%s277 + $0x70] sm:$0xff]
        %v310 = vld [vmem:[%s277 + $0x78] sm:$0xff]
        %312 = vset.pattern.permute.xlu0 0
        %313 = vperm.xlu0 %312, %v287
        %v314 = vpop.permute.xlu0 %313
        %317 = vset.pattern.permute.xlu0 0
        %318 = vperm.xlu0 %317, %v288
        %v319 = vpop.permute.xlu0 %318
        %322 = vset.pattern.permute.xlu0 0
        %323 = vperm.xlu0 %322, %v289
        %v324 = vpop.permute.xlu0 %323
        %327 = vset.pattern.permute.xlu0 0
        %328 = vperm.xlu0 %327, %v290
        %v329 = vpop.permute.xlu0 %328
        %332 = vset.pattern.permute.xlu0 0
        %333 = vperm.xlu0 %332, %v291
        %v334 = vpop.permute.xlu0 %333
        %337 = vset.pattern.permute.xlu0 0
        %338 = vperm.xlu0 %337, %v292
        %v339 = vpop.permute.xlu0 %338
        %342 = vset.pattern.permute.xlu0 0
        %343 = vperm.xlu0 %342, %v293
        %v344 = vpop.permute.xlu0 %343
        %347 = vset.pattern.permute.xlu0 0
        %348 = vperm.xlu0 %347, %v294
        %v349 = vpop.permute.xlu0 %348
        %vm351 = vcmask 130048
        %v353 = vsel %vm351, %v279, 0
        %v356 = vsel %vm351, %v280, 0
        %v359 = vsel %vm351, %v281, 0
        %v362 = vsel %vm351, %v282, 0
        %v365 = vsel %vm351, %v283, 0
        %v368 = vsel %vm351, %v284, 0
        %v371 = vsel %vm351, %v285, 0
        %v374 = vsel %vm351, %v286, 0
        %v377 = vsel %vm351, %v295, 0
        %v380 = vsel %vm351, %v296, 0
        %v383 = vsel %vm351, %v297, 0
        %v386 = vsel %vm351, %v298, 0
        %v389 = vsel %vm351, %v299, 0
        %v392 = vsel %vm351, %v300, 0
        %v395 = vsel %vm351, %v301, 0
        %v398 = vsel %vm351, %v302, 0
        %v401 = vsel %vm351, %v303, 0
        %v404 = vsel %vm351, %v304, 0
        %v407 = vsel %vm351, %v305, 0
        %v410 = vsel %vm351, %v306, 0
        %v413 = vsel %vm351, %v307, 0
        %v416 = vsel %vm351, %v308, 0
        %v419 = vsel %vm351, %v309, 0
        %v422 = vsel %vm351, %v310, 0
        %424 = vmatpush.xpose.msra.mxu0 %v422
        %425 = vmatpush.xpose.msra.mxu0 %v419
        %426 = vmatpush.xpose.msra.mxu0 %v416
        %427 = vmatpush.xpose.msra.mxu0 %v413
        %428 = vmatpush.xpose.msra.mxu0 %v410
        %429 = vmatpush.xpose.msra.mxu0 %v407
        %430 = vmatpush.xpose.msra.mxu0 %v404
        %431 = vmatpush.xpose.msra.mxu0 %v401
        %432 = vmatpush.xpose.msra.mxu0 %v398
        %433 = vmatpush.xpose.msra.mxu0 %v395
        %434 = vmatpush.xpose.msra.mxu0 %v392
        %435 = vmatpush.xpose.msra.mxu0 %v389
        %436 = vmatpush.xpose.msra.mxu0 %v386
        %437 = vmatpush.xpose.msra.mxu0 %v383
        %438 = vmatpush.xpose.msra.mxu0 %v380
        %439 = vmatpush.xpose.msra.mxu0 %v377
        %440 = vmatmul.f32.gmra.mxu0 %v353
        %v441 = vpop.f32.mrf.mxu0
        %v442 = vadd.f32 %v314, %v441
        %443 = vmatmul.f32.gmra.mxu0 %v356
        %v444 = vpop.f32.mrf.mxu0
        %v445 = vadd.f32 %v319, %v444
        %446 = vmatmul.f32.gmra.mxu0 %v359
        %v447 = vpop.f32.mrf.mxu0
        %v448 = vadd.f32 %v324, %v447
        %449 = vmatmul.f32.gmra.mxu0 %v362
        %v450 = vpop.f32.mrf.mxu0
        %v451 = vadd.f32 %v329, %v450
        %452 = vmatmul.f32.gmra.mxu0 %v365
        %v453 = vpop.f32.mrf.mxu0
        %v454 = vadd.f32 %v334, %v453
        %455 = vmatmul.f32.gmra.mxu0 %v368
        %v456 = vpop.f32.mrf.mxu0
        %v457 = vadd.f32 %v339, %v456
        %458 = vmatmul.f32.gmra.mxu0 %v371
        %v459 = vpop.f32.mrf.mxu0
        %v460 = vadd.f32 %v344, %v459
        %461 = vmatmul.f32.gmra.mxu0 %v374
        %v462 = vpop.f32.mrf.mxu0
        %v463 = vadd.f32 %v349, %v462
        %464 = vdwg.mxu0
        %v465 = vmax.f32 %v442, 0.0
        %v466 = vmax.f32 %v445, 0.0
        %v467 = vmax.f32 %v448, 0.0
        %v468 = vmax.f32 %v451, 0.0
        %v469 = vmax.f32 %v454, 0.0
        %v470 = vmax.f32 %v457, 0.0
        %v471 = vmax.f32 %v460, 0.0
        %v472 = vmax.f32 %v463, 0.0
        %v473 = vld [vmem:[%s3] sm:$0xff]
        %v474 = vld [vmem:[%s3 + $0x8] sm:$0xff]
        %v475 = vld [vmem:[%s3 + $0x10] sm:$0xff]
        %v476 = vld [vmem:[%s3 + $0x18] sm:$0xff]
        %v477 = vld [vmem:[%s3 + $0x20] sm:$0xff]
        %v478 = vld [vmem:[%s3 + $0x28] sm:$0xff]
        %v479 = vld [vmem:[%s3 + $0x30] sm:$0xff]
        %v480 = vld [vmem:[%s3 + $0x38] sm:$0xff]
        %v481 = vld [vmem:[%s4] sm:$0xff]
        %v482 = vld [vmem:[%s4 + $0x8] sm:$0xff]
        %v483 = vld [vmem:[%s4 + $0x10] sm:$0xff]
        %v484 = vld [vmem:[%s4 + $0x18] sm:$0xff]
        %v485 = vld [vmem:[%s4 + $0x20] sm:$0xff]
        %v486 = vld [vmem:[%s4 + $0x28] sm:$0xff]
        %v487 = vld [vmem:[%s4 + $0x30] sm:$0xff]
        %v488 = vld [vmem:[%s4 + $0x38] sm:$0xff]
        %490 = vset.pattern.permute.xlu0 0
        %491 = vperm.xlu0 %490, %v481
        %v492 = vpop.permute.xlu0 %491
        %495 = vset.pattern.permute.xlu0 0
        %496 = vperm.xlu0 %495, %v482
        %v497 = vpop.permute.xlu0 %496
        %500 = vset.pattern.permute.xlu0 0
        %501 = vperm.xlu0 %500, %v483
        %v502 = vpop.permute.xlu0 %501
        %505 = vset.pattern.permute.xlu0 0
        %506 = vperm.xlu0 %505, %v484
        %v507 = vpop.permute.xlu0 %506
        %510 = vset.pattern.permute.xlu0 0
        %511 = vperm.xlu0 %510, %v485
        %v512 = vpop.permute.xlu0 %511
        %515 = vset.pattern.permute.xlu0 0
        %516 = vperm.xlu0 %515, %v486
        %v517 = vpop.permute.xlu0 %516
        %520 = vset.pattern.permute.xlu0 0
        %521 = vperm.xlu0 %520, %v487
        %v522 = vpop.permute.xlu0 %521
        %525 = vset.pattern.permute.xlu0 0
        %526 = vperm.xlu0 %525, %v488
        %v527 = vpop.permute.xlu0 %526
        %vm529 = vcmask 523264
        %v531 = vsel %vm529, %v473, 0
        %v534 = vsel %vm529, %v474, 0
        %v537 = vsel %vm529, %v475, 0
        %v540 = vsel %vm529, %v476, 0
        %v543 = vsel %vm529, %v477, 0
        %v546 = vsel %vm529, %v478, 0
        %v549 = vsel %vm529, %v479, 0
        %v552 = vsel %vm529, %v480, 0
        %554 = vmatpush.msra.mxu0 0.0
        %555 = vmatpush.msra.mxu0 0.0
        %556 = vmatpush.msra.mxu0 0.0
        %557 = vmatpush.msra.mxu0 0.0
        %558 = vmatpush.msra.mxu0 0.0
        %559 = vmatpush.msra.mxu0 0.0
        %560 = vmatpush.msra.mxu0 0.0
        %561 = vmatpush.msra.mxu0 0.0
        %562 = vmatpush.msra.mxu0 %v472
        %563 = vmatpush.msra.mxu0 %v471
        %564 = vmatpush.msra.mxu0 %v470
        %565 = vmatpush.msra.mxu0 %v469
        %566 = vmatpush.msra.mxu0 %v468
        %567 = vmatpush.msra.mxu0 %v467
        %568 = vmatpush.msra.mxu0 %v466
        %569 = vmatpush.msra.mxu0 %v465
        %570 = vmatmul.f32.gmra.mxu0 %v531
        %v571 = vpop.f32.mrf.mxu0
        %v572 = vadd.f32 %v492, %v571
        %573 = vmatmul.f32.gmra.mxu0 %v534
        %v574 = vpop.f32.mrf.mxu0
        %v575 = vadd.f32 %v497, %v574
        %576 = vmatmul.f32.gmra.mxu0 %v537
        %v577 = vpop.f32.mrf.mxu0
        %v578 = vadd.f32 %v502, %v577
        %579 = vmatmul.f32.gmra.mxu0 %v540
        %v580 = vpop.f32.mrf.mxu0
        %v581 = vadd.f32 %v507, %v580
        %582 = vmatmul.f32.gmra.mxu0 %v543
        %v583 = vpop.f32.mrf.mxu0
        %v584 = vadd.f32 %v512, %v583
        %585 = vmatmul.f32.gmra.mxu0 %v546
        %v586 = vpop.f32.mrf.mxu0
        %v587 = vadd.f32 %v517, %v586
        %588 = vmatmul.f32.gmra.mxu0 %v549
        %v589 = vpop.f32.mrf.mxu0
        %v590 = vadd.f32 %v522, %v589
        %591 = vmatmul.f32.gmra.mxu0 %v552
        %v592 = vpop.f32.mrf.mxu0
        %v593 = vadd.f32 %v527, %v592
        %594 = vdwg.mxu0
        %v595 = vmax.f32 %v572, 0.0
        %v596 = vmax.f32 %v575, 0.0
        %v597 = vmax.f32 %v578, 0.0
        %v598 = vmax.f32 %v581, 0.0
        %v599 = vmax.f32 %v584, 0.0
        %v600 = vmax.f32 %v587, 0.0
        %v601 = vmax.f32 %v590, 0.0
        %v602 = vmax.f32 %v593, 0.0
        %v603 = vld [vmem:[%s5] sm:$0xff]
        %v604 = vld [vmem:[%s6] sm:$0xff]
        %606 = vset.pattern.permute.xlu0 0
        %607 = vperm.xlu0 %606, %v604
        %v608 = vpop.permute.xlu0 %607
        %v611 = vsel %vm529, %v603, 0
        %613 = vmatpush.msra.mxu0 0.0
        %614 = vmatpush.msra.mxu0 0.0
        %615 = vmatpush.msra.mxu0 0.0
        %616 = vmatpush.msra.mxu0 0.0
        %617 = vmatpush.msra.mxu0 0.0
        %618 = vmatpush.msra.mxu0 0.0
        %619 = vmatpush.msra.mxu0 0.0
        %620 = vmatpush.msra.mxu0 0.0
        %621 = vmatpush.msra.mxu0 %v602
        %622 = vmatpush.msra.mxu0 %v601
        %623 = vmatpush.msra.mxu0 %v600
        %624 = vmatpush.msra.mxu0 %v599
        %625 = vmatpush.msra.mxu0 %v598
        %626 = vmatpush.msra.mxu0 %v597
        %627 = vmatpush.msra.mxu0 %v596
        %628 = vmatpush.msra.mxu0 %v595
        %629 = vmatmul.f32.gmra.mxu0 %v611
        %v630 = vpop.f32.mrf.mxu0
        %v631 = vadd.f32 %v608, %v630
        %632 = vdwg.mxu0
        %633 = vst [vmem:[%s272] sm:$0xff] %v631
        %s634 = sand.u32 %s181, 1
        %s635 = scalar_lea.sflag [#allocation3], %s634
        %s636 = sand.u32 %s181, 1
        %s637 = smul.addr %s636, 8
        %s638 = scalar_lea.vmem [#allocation2], %s637
        // Predicated region
        $region49: #{tpu_custom_call.1} parent=47 // pred_check
          %p639 = pneg %p191
        $region50: #{tpu_custom_call.1} parent=47 // pred_check_branch
          %641 = sbr.rel (%p639) target = $region52
        $region51: #{tpu_custom_call.1} parent=47 // pred_region
          %643 = vsyncadd %s635, 0
          %s644 = smul.addr %s21, 8
          %s645 = scalar_lea.hbm %s7, %s644
          %s647 = sshll.u32 %s638, 4
          %s648 = int_to_ptr.vmem [resolvable:$true] %s647
          %s649 = sshll.u32 %s645, 4
          %s650 = int_to_ptr.hbm [resolvable:$true] %s649
          %652 = dma.vmem_to_hbm [thread:$0]  %s648, 128, %s650, %s635
        $region52: #{tpu_custom_call.1} parent=47 // pred_fallthru
          _
      $region48: #{tpu_custom_call.1} parent=5 // pred_fallthru
        _
      %p653 = scmp.le.s32.totalorder 2, %s16
      // Predicated region
      $region53: #{tpu_custom_call.1} parent=5 // pred_check
        %p654 = pneg %p653
      $region54: #{tpu_custom_call.1} parent=5 // pred_check_branch
        %656 = sbr.rel (%p654) target = $region56
      $region55: #{tpu_custom_call.1} parent=5 // pred_region
        %s657 = ssub.s32 %s16, 2
        // Predicated region
        $region57: #{tpu_custom_call.1} parent=55 // pred_check
          %p658 = pneg %p197
        $region58: #{tpu_custom_call.1} parent=55 // pred_check_branch
          %660 = sbr.rel (%p658) target = $region60
        $region59: #{tpu_custom_call.1} parent=55 // pred_region
          %s661 = sand.u32 %s182, 1
          %s662 = scalar_lea.sflag [#allocation3], %s661
          %s663 = sand.u32 %s182, 1
          %s664 = smul.addr %s663, 8
          %s665 = scalar_lea.vmem [#allocation2], %s664
          %667 = dma.done %s662, 128
        $region60: #{tpu_custom_call.1} parent=55 // pred_fallthru
          _
      $region56: #{tpu_custom_call.1} parent=5 // pred_fallthru
        _
    $region6: #{tpu_custom_call.1} parent=1 // loop_footer
      %s20 = sadd.s32 1, %s16
    $region7: #{tpu_custom_call.1} parent=1 // loop_footer_branch
      %15 = sbr.rel target = $region3
    $region8: #{tpu_custom_call.1} parent=1 // loop_exit
      _
    %668 = vsyncpa [#allocation3], 1
    %s669 = scalar_lea.sflag [#allocation3], 1
    %670 = vsyncpa %s669, 1

</llo_original>
